<compile_context>
chip_gen: v5e
topology: v5e:2x2
jax: 0.10.0
libtpu: 0.0.40
codegen_flags: <defaults>
</compile_context>

<pallas_src>
import functools
import math

import jax
import jax.numpy as jnp
from jax.experimental import pallas as pl
from jax.experimental.pallas import tpu as pltpu


def _autoencoder_kernel(x_ref,
                        w1, b1, w2, b2, w3, b3, w4, b4, w5, b5, w6, b6,
                        o_ref, *, matmul_dtype):
    """Fused 6-layer MLP: h -> act(h @ W' + b') chained, all resident in VMEM/vregs."""

    def layer(h, w_ref, b_ref, act):
        y = jnp.dot(h.astype(matmul_dtype), w_ref[...].astype(matmul_dtype),
                    preferred_element_type=jnp.float32)   # MXU, f32 accumulation
        y = y + b_ref[...]                                # (1, N) broadcasts over batch rows
        if act == "relu":
            y = jnp.maximum(y, 0.0)                       # VPU
        elif act == "sigmoid":
            y = jax.nn.sigmoid(y)                         # EUP
        return y

    h = x_ref[...].astype(jnp.float32)
    h = layer(h, w1, b1, "relu")      # Linear(in,256)+BN+ReLU   (Dropout = identity in eval)
    h = layer(h, w2, b2, "relu")      # Linear(256,128)+BN+ReLU
    h = layer(h, w3, b3, "relu")      # Linear(128,64)+BN+ReLU   -> encoded
    h = layer(h, w4, b4, "relu")      # Linear(64,128)+BN+ReLU
    h = layer(h, w5, b5, "relu")      # Linear(128,256)+BN+ReLU
    h = layer(h, w6, b6, "sigmoid")   # Linear(256,in)+Sigmoid (no BN)
    o_ref[...] = h.astype(o_ref.dtype)


def autoencoder_forward(x, params, *, matmul_dtype=jnp.float32, batch_tile=512):
    """Run the whole autoencoder forward pass as one fused Pallas kernel.

    params: list of 6 (W_folded[(in,out)], b_folded[(1,out)]) pairs from make_autoencoder_params.
    """
    B, D_in = x.shape
    TB = B if B <= batch_tile else batch_tile
    assert TB == B or TB % 8 == 0, "batch tile must be a multiple of 8 sublanes"

    flat_params = []
    param_specs = []
    for (w, b) in params:
        flat_params += [w, b]
        # Weights/biases: full-array blocks with a constant block index -> the pipeline
        # fetches them once and keeps the same VMEM copy resident across all grid steps.
        param_specs.append(pl.BlockSpec(w.shape, lambda i: (0, 0)))
        param_specs.append(pl.BlockSpec(b.shape, lambda i: (0, 0)))

    grid = (pl.cdiv(B, TB),)                 # partial last tile OK: rows are independent,
    in_specs = [pl.BlockSpec((TB, D_in), lambda i: (i, 0))] + param_specs
    out_specs = pl.BlockSpec((TB, D_in), lambda i: (i, 0))   # OOB rows masked on writeback

    return pl.pallas_call(
        functools.partial(_autoencoder_kernel, matmul_dtype=matmul_dtype),
        grid=grid,
        in_specs=in_specs,
        out_specs=out_specs,
        out_shape=jax.ShapeDtypeStruct((B, D_in), jnp.float32),
        compiler_params=pltpu.CompilerParams(dimension_semantics=("parallel",)),
    )(x, *flat_params)


def init_linear(key, fan_in, fan_out):
    """PyTorch nn.Linear default init: U(-1/sqrt(fan_in), 1/sqrt(fan_in))."""
    kw, kb = jax.random.split(key)
    bound = 1.0 / math.sqrt(fan_in)
    w = jax.random.uniform(kw, (fan_in, fan_out), jnp.float32, -bound, bound)
    b = jax.random.uniform(kb, (fan_out,), jnp.float32, -bound, bound)
    return w, b


def fold_batchnorm(w, b, gamma, beta, running_mean, running_var, eps=1e-5):
    """Fold eval-mode BatchNorm1d (running stats) into the preceding Linear's weight/bias."""
    scale = gamma / jnp.sqrt(running_var + eps)
    shift = beta - running_mean * scale
    return w * scale[None, :], b * scale + shift


def make_autoencoder_params(input_dim, key):
    """Build the 6 Linear layers; BN (nn.BatchNorm1d defaults: gamma=1, beta=0, mean=0, var=1)
    is folded into (W', b') here, once, so the in-kernel layer is pure matmul+bias+activation."""
    dims = [(input_dim, 256), (256, 128), (128, 64),
            (64, 128), (128, 256), (256, input_dim)]
    has_bn = [True, True, True, True, True, False]
    keys = jax.random.split(key, len(dims))
    params = []
    for (fi, fo), bn, k in zip(dims, has_bn, keys):
        w, b = init_linear(k, fi, fo)
        if bn:
            gamma = jnp.ones((fo,), jnp.float32)
            beta = jnp.zeros((fo,), jnp.float32)
            running_mean = jnp.zeros((fo,), jnp.float32)
            running_var = jnp.ones((fo,), jnp.float32)
            w, b = fold_batchnorm(w, b, gamma, beta, running_mean, running_var)
        params.append((w, b.reshape(1, fo)))
    return params
    # TODO(synk): training-mode BatchNorm (batch statistics) and Dropout masking are not
    # implemented; this kernel reproduces eval()-mode forward semantics.


def autoencoder_forward_ref(x, params):
    """Pure-JAX reference (same folded params, same layer order) for correctness checking."""
    h = x
    n = len(params)
    for idx, (w, b) in enumerate(params):
        h = jnp.dot(h, w, precision=jax.lax.Precision.HIGHEST) + b
        h = jax.nn.sigmoid(h) if idx == n - 1 else jnp.maximum(h, 0.0)
    return h


if __name__ == "__main__":
    input_dim = 32
    batch = 8
    key = jax.random.PRNGKey(0)
    k_x, k_p = jax.random.split(key)
    x = jax.random.uniform(k_x, (batch, input_dim), jnp.float32)  # x shape: (B, input_dim)
    params = make_autoencoder_params(input_dim, k_p)

    fwd = jax.jit(autoencoder_forward)           # single fused kernel, scheduled by XLA
    out = jax.block_until_ready(fwd(x, params))

    # Shape / range / numerics checks against a pure-JAX reference of the same math.
    assert out.shape == (batch, input_dim)
    assert bool(jnp.all(jnp.isfinite(out)))
    assert bool(jnp.all((out >= 0.0) & (out <= 1.0)))            # sigmoid output range
    ref = autoencoder_forward_ref(x, params)
    assert bool(jnp.allclose(out, ref, rtol=5e-3, atol=5e-4)), (
        float(jnp.max(jnp.abs(out - ref))))
    print("KERNEL_OK")
</pallas_src>

<mosaic_0001>
module attributes {stable_mosaic.version = 11 : i64} {
  func.func @_autoencoder_kernel(%arg0: i32, %arg1: memref<8x32xf32, #tpu.memory_space<vmem>>, %arg2: memref<32x256xf32, #tpu.memory_space<vmem>>, %arg3: memref<1x256xf32, #tpu.memory_space<vmem>>, %arg4: memref<256x128xf32, #tpu.memory_space<vmem>>, %arg5: memref<1x128xf32, #tpu.memory_space<vmem>>, %arg6: memref<128x64xf32, #tpu.memory_space<vmem>>, %arg7: memref<1x64xf32, #tpu.memory_space<vmem>>, %arg8: memref<64x128xf32, #tpu.memory_space<vmem>>, %arg9: memref<1x128xf32, #tpu.memory_space<vmem>>, %arg10: memref<128x256xf32, #tpu.memory_space<vmem>>, %arg11: memref<1x256xf32, #tpu.memory_space<vmem>>, %arg12: memref<256x32xf32, #tpu.memory_space<vmem>>, %arg13: memref<1x32xf32, #tpu.memory_space<vmem>>, %arg14: memref<8x32xf32, #tpu.memory_space<vmem>>) attributes {dimension_semantics = [#tpu.dimension_semantics<parallel>], iteration_bounds = array<i64: 1>, scalar_prefetch = 0 : i64, scratch_operands = 0 : i64, tpu.core_type = #tpu.core_type<tc>, window_params = [{transform_indices = @transform_0, window_bounds = array<i64: 8, 32>}, {pipeline_mode = #tpu.pipeline_mode<synchronous>, transform_indices = @transform_1, window_bounds = array<i64: 32, 256>}, {pipeline_mode = #tpu.pipeline_mode<synchronous>, transform_indices = @transform_2, window_bounds = array<i64: 1, 256>}, {pipeline_mode = #tpu.pipeline_mode<synchronous>, transform_indices = @transform_3, window_bounds = array<i64: 256, 128>}, {pipeline_mode = #tpu.pipeline_mode<synchronous>, transform_indices = @transform_4, window_bounds = array<i64: 1, 128>}, {pipeline_mode = #tpu.pipeline_mode<synchronous>, transform_indices = @transform_5, window_bounds = array<i64: 128, 64>}, {pipeline_mode = #tpu.pipeline_mode<synchronous>, transform_indices = @transform_6, window_bounds = array<i64: 1, 64>}, {pipeline_mode = #tpu.pipeline_mode<synchronous>, transform_indices = @transform_7, window_bounds = array<i64: 64, 128>}, {pipeline_mode = #tpu.pipeline_mode<synchronous>, transform_indices = @transform_8, window_bounds = array<i64: 1, 128>}, {pipeline_mode = #tpu.pipeline_mode<synchronous>, transform_indices = @transform_9, window_bounds = array<i64: 128, 256>}, {pipeline_mode = #tpu.pipeline_mode<synchronous>, transform_indices = @transform_10, window_bounds = array<i64: 1, 256>}, {pipeline_mode = #tpu.pipeline_mode<synchronous>, transform_indices = @transform_11, window_bounds = array<i64: 256, 32>}, {pipeline_mode = #tpu.pipeline_mode<synchronous>, transform_indices = @transform_12, window_bounds = array<i64: 1, 32>}, {transform_indices = @transform_13, window_bounds = array<i64: 8, 32>}]} {
    %c0 = arith.constant 0 : index
    %c0_0 = arith.constant 0 : index
    %0 = vector.load %arg1[%c0, %c0_0] : memref<8x32xf32, #tpu.memory_space<vmem>>, vector<8x32xf32>
    %c0_1 = arith.constant 0 : index
    %c0_2 = arith.constant 0 : index
    %1 = vector.load %arg2[%c0_1, %c0_2] : memref<32x256xf32, #tpu.memory_space<vmem>>, vector<32x256xf32>
    %cst = arith.constant dense<0.000000e+00> : vector<8x256xf32>
    %2 = tpu.matmul %0, %1, %cst {dimension_numbers = #tpu.dot_dimension_numbers<[1], [0], [0], [1], [0, 0, 1, 1], [], []>} : vector<8x32xf32>, vector<32x256xf32>, vector<8x256xf32> -> vector<8x256xf32>
    %c0_3 = arith.constant 0 : index
    %c0_4 = arith.constant 0 : index
    %3 = vector.load %arg3[%c0_3, %c0_4] : memref<1x256xf32, #tpu.memory_space<vmem>>, vector<1x256xf32>
    %4 = vector.broadcast %3 : vector<1x256xf32> to vector<8x256xf32>
    %5 = arith.addf %2, %4 : vector<8x256xf32>
    %cst_5 = arith.constant 0.000000e+00 : f32
    %6 = vector.broadcast %cst_5 : f32 to vector<8x256xf32>
    %7 = arith.maximumf %5, %6 : vector<8x256xf32>
    %c0_6 = arith.constant 0 : index
    %c0_7 = arith.constant 0 : index
    %8 = vector.load %arg4[%c0_6, %c0_7] : memref<256x128xf32, #tpu.memory_space<vmem>>, vector<256x128xf32>
    %cst_8 = arith.constant dense<0.000000e+00> : vector<8x128xf32>
    %9 = tpu.matmul %7, %8, %cst_8 {dimension_numbers = #tpu.dot_dimension_numbers<[1], [0], [0], [1], [0, 0, 1, 1], [], []>} : vector<8x256xf32>, vector<256x128xf32>, vector<8x128xf32> -> vector<8x128xf32>
    %c0_9 = arith.constant 0 : index
    %c0_10 = arith.constant 0 : index
    %10 = vector.load %arg5[%c0_9, %c0_10] : memref<1x128xf32, #tpu.memory_space<vmem>>, vector<1x128xf32>
    %11 = vector.broadcast %10 : vector<1x128xf32> to vector<8x128xf32>
    %12 = arith.addf %9, %11 : vector<8x128xf32>
    %cst_11 = arith.constant 0.000000e+00 : f32
    %13 = vector.broadcast %cst_11 : f32 to vector<8x128xf32>
    %14 = arith.maximumf %12, %13 : vector<8x128xf32>
    %c0_12 = arith.constant 0 : index
    %c0_13 = arith.constant 0 : index
    %15 = vector.load %arg6[%c0_12, %c0_13] : memref<128x64xf32, #tpu.memory_space<vmem>>, vector<128x64xf32>
    %cst_14 = arith.constant dense<0.000000e+00> : vector<8x64xf32>
    %16 = tpu.matmul %14, %15, %cst_14 {dimension_numbers = #tpu.dot_dimension_numbers<[1], [0], [0], [1], [0, 0, 1, 1], [], []>} : vector<8x128xf32>, vector<128x64xf32>, vector<8x64xf32> -> vector<8x64xf32>
    %c0_15 = arith.constant 0 : index
    %c0_16 = arith.constant 0 : index
    %17 = vector.load %arg7[%c0_15, %c0_16] : memref<1x64xf32, #tpu.memory_space<vmem>>, vector<1x64xf32>
    %18 = vector.broadcast %17 : vector<1x64xf32> to vector<8x64xf32>
    %19 = arith.addf %16, %18 : vector<8x64xf32>
    %cst_17 = arith.constant 0.000000e+00 : f32
    %20 = vector.broadcast %cst_17 : f32 to vector<8x64xf32>
    %21 = arith.maximumf %19, %20 : vector<8x64xf32>
    %c0_18 = arith.constant 0 : index
    %c0_19 = arith.constant 0 : index
    %22 = vector.load %arg8[%c0_18, %c0_19] : memref<64x128xf32, #tpu.memory_space<vmem>>, vector<64x128xf32>
    %cst_20 = arith.constant dense<0.000000e+00> : vector<8x128xf32>
    %23 = tpu.matmul %21, %22, %cst_20 {dimension_numbers = #tpu.dot_dimension_numbers<[1], [0], [0], [1], [0, 0, 1, 1], [], []>} : vector<8x64xf32>, vector<64x128xf32>, vector<8x128xf32> -> vector<8x128xf32>
    %c0_21 = arith.constant 0 : index
    %c0_22 = arith.constant 0 : index
    %24 = vector.load %arg9[%c0_21, %c0_22] : memref<1x128xf32, #tpu.memory_space<vmem>>, vector<1x128xf32>
    %25 = vector.broadcast %24 : vector<1x128xf32> to vector<8x128xf32>
    %26 = arith.addf %23, %25 : vector<8x128xf32>
    %cst_23 = arith.constant 0.000000e+00 : f32
    %27 = vector.broadcast %cst_23 : f32 to vector<8x128xf32>
    %28 = arith.maximumf %26, %27 : vector<8x128xf32>
    %c0_24 = arith.constant 0 : index
    %c0_25 = arith.constant 0 : index
    %29 = vector.load %arg10[%c0_24, %c0_25] : memref<128x256xf32, #tpu.memory_space<vmem>>, vector<128x256xf32>
    %cst_26 = arith.constant dense<0.000000e+00> : vector<8x256xf32>
    %30 = tpu.matmul %28, %29, %cst_26 {dimension_numbers = #tpu.dot_dimension_numbers<[1], [0], [0], [1], [0, 0, 1, 1], [], []>} : vector<8x128xf32>, vector<128x256xf32>, vector<8x256xf32> -> vector<8x256xf32>
    %c0_27 = arith.constant 0 : index
    %c0_28 = arith.constant 0 : index
    %31 = vector.load %arg11[%c0_27, %c0_28] : memref<1x256xf32, #tpu.memory_space<vmem>>, vector<1x256xf32>
    %32 = vector.broadcast %31 : vector<1x256xf32> to vector<8x256xf32>
    %33 = arith.addf %30, %32 : vector<8x256xf32>
    %cst_29 = arith.constant 0.000000e+00 : f32
    %34 = vector.broadcast %cst_29 : f32 to vector<8x256xf32>
    %35 = arith.maximumf %33, %34 : vector<8x256xf32>
    %c0_30 = arith.constant 0 : index
    %c0_31 = arith.constant 0 : index
    %36 = vector.load %arg12[%c0_30, %c0_31] : memref<256x32xf32, #tpu.memory_space<vmem>>, vector<256x32xf32>
    %cst_32 = arith.constant dense<0.000000e+00> : vector<8x32xf32>
    %37 = tpu.matmul %35, %36, %cst_32 {dimension_numbers = #tpu.dot_dimension_numbers<[1], [0], [0], [1], [0, 0, 1, 1], [], []>} : vector<8x256xf32>, vector<256x32xf32>, vector<8x32xf32> -> vector<8x32xf32>
    %c0_33 = arith.constant 0 : index
    %c0_34 = arith.constant 0 : index
    %38 = vector.load %arg13[%c0_33, %c0_34] : memref<1x32xf32, #tpu.memory_space<vmem>>, vector<1x32xf32>
    %39 = vector.broadcast %38 : vector<1x32xf32> to vector<8x32xf32>
    %40 = arith.addf %37, %39 : vector<8x32xf32>
    %41 = arith.negf %40 : vector<8x32xf32>
    %42 = math.exp %41 : vector<8x32xf32>
    %cst_35 = arith.constant 1.000000e+00 : f32
    %43 = vector.broadcast %cst_35 : f32 to vector<8x32xf32>
    %44 = arith.addf %43, %42 : vector<8x32xf32>
    %45 = arith.divf %43, %44 : vector<8x32xf32>
    %c0_36 = arith.constant 0 : index
    %c0_37 = arith.constant 0 : index
    %46 = vector.load %arg14[%c0_36, %c0_37] : memref<8x32xf32, #tpu.memory_space<vmem>>, vector<8x32xf32>
    tpu.vector_store %arg14[%c0_36, %c0_37], %45 {strides = array<i32>} : memref<8x32xf32, #tpu.memory_space<vmem>>, vector<8x32xf32>,
    return
  }
  func.func @transform_0(%arg0: i32) -> (i32, i32) {
    %c0_i32 = arith.constant 0 : i32
    %c0_i32_0 = arith.constant 0 : i32
    return %arg0, %c0_i32 : i32, i32
  }
  func.func @transform_1(%arg0: i32) -> (i32, i32) {
    %c0_i32 = arith.constant 0 : i32
    %c0_i32_0 = arith.constant 0 : i32
    %c0_i32_1 = arith.constant 0 : i32
    return %c0_i32, %c0_i32_0 : i32, i32
  }
  func.func @transform_2(%arg0: i32) -> (i32, i32) {
    %c0_i32 = arith.constant 0 : i32
    %c0_i32_0 = arith.constant 0 : i32
    %c0_i32_1 = arith.constant 0 : i32
    return %c0_i32, %c0_i32_0 : i32, i32
  }
  func.func @transform_3(%arg0: i32) -> (i32, i32) {
    %c0_i32 = arith.constant 0 : i32
    %c0_i32_0 = arith.constant 0 : i32
    %c0_i32_1 = arith.constant 0 : i32
    return %c0_i32, %c0_i32_0 : i32, i32
  }
  func.func @transform_4(%arg0: i32) -> (i32, i32) {
    %c0_i32 = arith.constant 0 : i32
    %c0_i32_0 = arith.constant 0 : i32
    %c0_i32_1 = arith.constant 0 : i32
    return %c0_i32, %c0_i32_0 : i32, i32
  }
  func.func @transform_5(%arg0: i32) -> (i32, i32) {
    %c0_i32 = arith.constant 0 : i32
    %c0_i32_0 = arith.constant 0 : i32
    %c0_i32_1 = arith.constant 0 : i32
    return %c0_i32, %c0_i32_0 : i32, i32
  }
  func.func @transform_6(%arg0: i32) -> (i32, i32) {
    %c0_i32 = arith.constant 0 : i32
    %c0_i32_0 = arith.constant 0 : i32
    %c0_i32_1 = arith.constant 0 : i32
    return %c0_i32, %c0_i32_0 : i32, i32
  }
  func.func @transform_7(%arg0: i32) -> (i32, i32) {
    %c0_i32 = arith.constant 0 : i32
    %c0_i32_0 = arith.constant 0 : i32
    %c0_i32_1 = arith.constant 0 : i32
    return %c0_i32, %c0_i32_0 : i32, i32
  }
  func.func @transform_8(%arg0: i32) -> (i32, i32) {
    %c0_i32 = arith.constant 0 : i32
    %c0_i32_0 = arith.constant 0 : i32
    %c0_i32_1 = arith.constant 0 : i32
    return %c0_i32, %c0_i32_0 : i32, i32
  }
  func.func @transform_9(%arg0: i32) -> (i32, i32) {
    %c0_i32 = arith.constant 0 : i32
    %c0_i32_0 = arith.constant 0 : i32
    %c0_i32_1 = arith.constant 0 : i32
    return %c0_i32, %c0_i32_0 : i32, i32
  }
  func.func @transform_10(%arg0: i32) -> (i32, i32) {
    %c0_i32 = arith.constant 0 : i32
    %c0_i32_0 = arith.constant 0 : i32
    %c0_i32_1 = arith.constant 0 : i32
    return %c0_i32, %c0_i32_0 : i32, i32
  }
  func.func @transform_11(%arg0: i32) -> (i32, i32) {
    %c0_i32 = arith.constant 0 : i32
    %c0_i32_0 = arith.constant 0 : i32
    %c0_i32_1 = arith.constant 0 : i32
    return %c0_i32, %c0_i32_0 : i32, i32
  }
  func.func @transform_12(%arg0: i32) -> (i32, i32) {
    %c0_i32 = arith.constant 0 : i32
    %c0_i32_0 = arith.constant 0 : i32
    %c0_i32_1 = arith.constant 0 : i32
    return %c0_i32, %c0_i32_0 : i32, i32
  }
  func.func @transform_13(%arg0: i32) -> (i32, i32) {
    %c0_i32 = arith.constant 0 : i32
    %c0_i32_0 = arith.constant 0 : i32
    return %arg0, %c0_i32 : i32, i32
  }
}

</mosaic_0001>

<llo_original>
// kernel: autoencoder_forward.1
$region0: #{autoencoder_forward.1}
  #allocation0 [shape = 'u32[]', space=smem, size = 0x4, offset = 0x4, fixed_abs, tag = 'smem constant byte address 0x4 - core index']
  #allocation1 [shape = 'u32[72,128]{1,0:T(1,128)}', space=vmem, size = 0x9000, scoped, tag = 'internal scratch']
  %s0 = inlined_call_operand.vmem [shape: f32[8,32], index: 0, kind: input, shape index: {}]
  %s1 = inlined_call_operand.vmem [shape: f32[32,256], index: 1, kind: input, shape index: {}]
  %s2 = inlined_call_operand.vmem [shape: f32[1,256], index: 2, kind: input, shape index: {}]
  %s3 = inlined_call_operand.vmem [shape: f32[256,128], index: 3, kind: input, shape index: {}]
  %s4 = inlined_call_operand.vmem [shape: f32[1,128], index: 4, kind: input, shape index: {}]
  %s5 = inlined_call_operand.vmem [shape: f32[128,64], index: 5, kind: input, shape index: {}]
  %s6 = inlined_call_operand.vmem [shape: f32[1,64], index: 6, kind: input, shape index: {}]
  %s7 = inlined_call_operand.vmem [shape: f32[64,128], index: 7, kind: input, shape index: {}]
  %s8 = inlined_call_operand.vmem [shape: f32[1,128], index: 8, kind: input, shape index: {}]
  %s9 = inlined_call_operand.hbm [shape: f32[128,256], index: 9, kind: input, shape index: {}]
  %s10 = inlined_call_operand.vmem [shape: f32[1,256], index: 10, kind: input, shape index: {}]
  %s11 = inlined_call_operand.vmem [shape: f32[256,32], index: 11, kind: input, shape index: {}]
  %s12 = inlined_call_operand.vmem [shape: f32[1,32], index: 12, kind: input, shape index: {}]
  %s13 = inlined_call_operand.hbm [shape: f32[8,32], index: 13, kind: output, shape index: {}]
  %s14 = sld [smem:[#allocation0]]
  $region66: #{autoencoder_forward.1} parent=0
    _
  %s16 = ssub.s32 1, %s14
  %s17 = scalar_select 0, %s16, %s14
  $region1: #{autoencoder_forward.1} parent=0
    #allocation2 [shape = 'u8[131072]{0}', space=vmem, size = 0x20000, scoped, tag = 'input window, operand 9, single buffered']
    #allocation3 [shape = 's32[1]{0}', space=sflag, size = 0x4, scoped, tag = 'scoped memory for autoencoder_forward.1']
    #allocation4 [shape = 's32[1]{0}', space=sflag, size = 0x4, scoped, tag = 'scoped memory for autoencoder_forward.1']
    #allocation5 [shape = 'u8[4096]{0}', space=vmem, size = 0x1000, scoped, tag = 'output window, operand 0, single buffered']
    %18 = vsyncpa [#allocation3], 0
    %19 = vsyncpa [#allocation4], 0
    // Predicated region
    $region2: #{autoencoder_forward.1} parent=1 // pred_check
      _
    $region3: #{autoencoder_forward.1} parent=1 // pred_check_branch
      %21 = sbr.rel (0) target = $region5
    $region4: #{autoencoder_forward.1} parent=1 // pred_region
      _
    $region5: #{autoencoder_forward.1} parent=1 // pred_fallthru
      _
    // Predicated region
    $region6: #{autoencoder_forward.1} parent=1 // pred_check
      _
    $region7: #{autoencoder_forward.1} parent=1 // pred_check_branch
      %23 = sbr.rel (0) target = $region9
    $region8: #{autoencoder_forward.1} parent=1 // pred_region
      _
    $region9: #{autoencoder_forward.1} parent=1 // pred_fallthru
      _
    // Predicated region
    $region10: #{autoencoder_forward.1} parent=1 // pred_check
      _
    $region11: #{autoencoder_forward.1} parent=1 // pred_check_branch
      %25 = sbr.rel (0) target = $region13
    $region12: #{autoencoder_forward.1} parent=1 // pred_region
      _
    $region13: #{autoencoder_forward.1} parent=1 // pred_fallthru
      _
    // Predicated region
    $region14: #{autoencoder_forward.1} parent=1 // pred_check
      _
    $region15: #{autoencoder_forward.1} parent=1 // pred_check_branch
      %27 = sbr.rel (0) target = $region17
    $region16: #{autoencoder_forward.1} parent=1 // pred_region
      _
    $region17: #{autoencoder_forward.1} parent=1 // pred_fallthru
      _
    // Predicated region
    $region18: #{autoencoder_forward.1} parent=1 // pred_check
      _
    $region19: #{autoencoder_forward.1} parent=1 // pred_check_branch
      %29 = sbr.rel (0) target = $region21
    $region20: #{autoencoder_forward.1} parent=1 // pred_region
      _
    $region21: #{autoencoder_forward.1} parent=1 // pred_fallthru
      _
    // Predicated region
    $region22: #{autoencoder_forward.1} parent=1 // pred_check
      _
    $region23: #{autoencoder_forward.1} parent=1 // pred_check_branch
      %31 = sbr.rel (0) target = $region25
    $region24: #{autoencoder_forward.1} parent=1 // pred_region
      _
    $region25: #{autoencoder_forward.1} parent=1 // pred_fallthru
      _
    // Predicated region
    $region26: #{autoencoder_forward.1} parent=1 // pred_check
      _
    $region27: #{autoencoder_forward.1} parent=1 // pred_check_branch
      %33 = sbr.rel (0) target = $region29
    $region28: #{autoencoder_forward.1} parent=1 // pred_region
      _
    $region29: #{autoencoder_forward.1} parent=1 // pred_fallthru
      _
    // Predicated region
    $region30: #{autoencoder_forward.1} parent=1 // pred_check
      _
    $region31: #{autoencoder_forward.1} parent=1 // pred_check_branch
      %35 = sbr.rel (0) target = $region33
    $region32: #{autoencoder_forward.1} parent=1 // pred_region
      _
    $region33: #{autoencoder_forward.1} parent=1 // pred_fallthru
      _
    // Predicated region
    $region34: #{autoencoder_forward.1} parent=1 // pred_check
      _
    $region35: #{autoencoder_forward.1} parent=1 // pred_check_branch
      %37 = sbr.rel (0) target = $region37
    $region36: #{autoencoder_forward.1} parent=1 // pred_region
      _
    $region37: #{autoencoder_forward.1} parent=1 // pred_fallthru
      _
    // Predicated region
    $region38: #{autoencoder_forward.1} parent=1 // pred_check
      _
    $region39: #{autoencoder_forward.1} parent=1 // pred_check_branch
      %39 = sbr.rel (0) target = $region41
    $region40: #{autoencoder_forward.1} parent=1 // pred_region
      %41 = vsyncadd [#allocation3], 0
      %s42 = sshll.u32 %s9, 4
      %s43 = int_to_ptr.hbm [resolvable:$true] %s42
      %s44 = sshll.u32 [#allocation2], 4
      %s45 = int_to_ptr.vmem [resolvable:$true] %s44
      %50 = dma.hbm_to_vmem [thread:$0]  %s43, 4096, %s45, [#allocation3], 256, 256, 16
    $region41: #{autoencoder_forward.1} parent=1 // pred_fallthru
      _
    // Predicated region
    $region42: #{autoencoder_forward.1} parent=1 // pred_check
      _
    $region43: #{autoencoder_forward.1} parent=1 // pred_check_branch
      %52 = sbr.rel (0) target = $region45
    $region44: #{autoencoder_forward.1} parent=1 // pred_region
      _
    $region45: #{autoencoder_forward.1} parent=1 // pred_fallthru
      _
    // Predicated region
    $region46: #{autoencoder_forward.1} parent=1 // pred_check
      _
    $region47: #{autoencoder_forward.1} parent=1 // pred_check_branch
      %54 = sbr.rel (0) target = $region49
    $region48: #{autoencoder_forward.1} parent=1 // pred_region
      _
    $region49: #{autoencoder_forward.1} parent=1 // pred_fallthru
      _
    // Predicated region
    $region50: #{autoencoder_forward.1} parent=1 // pred_check
      _
    $region51: #{autoencoder_forward.1} parent=1 // pred_check_branch
      %56 = sbr.rel (0) target = $region53
    $region52: #{autoencoder_forward.1} parent=1 // pred_region
      _
    $region53: #{autoencoder_forward.1} parent=1 // pred_fallthru
      _
    // Predicated region
    $region54: #{autoencoder_forward.1} parent=1 // pred_check
      _
    $region55: #{autoencoder_forward.1} parent=1 // pred_check_branch
      %58 = sbr.rel (0) target = $region57
    $region56: #{autoencoder_forward.1} parent=1 // pred_region
      %60 = dma.done [#allocation3], 4096
    $region57: #{autoencoder_forward.1} parent=1 // pred_fallthru
      _
    %v61 = vld [vmem:[%s0] sm:$0xff]
    %v62 = vld [vmem:[%s1] sm:$0xff]
    %v63 = vld [vmem:[%s1 + $0x8] sm:$0xff]
    %v64 = vld [vmem:[%s1 + $0x10] sm:$0xff]
    %v65 = vld [vmem:[%s1 + $0x18] sm:$0xff]
    %v66 = vld [vmem:[%s1 + $0x20] sm:$0xff]
    %v67 = vld [vmem:[%s1 + $0x28] sm:$0xff]
    %v68 = vld [vmem:[%s1 + $0x30] sm:$0xff]
    %v69 = vld [vmem:[%s1 + $0x38] sm:$0xff]
    %v70 = vld [vmem:[%s2] sm:$0x3]
    %v72 = vperm.slane %v70, 0
    %v73 = vperm.slane %v70, 1
    %vm76 = vcmask 261120
    %v78 = vsel %vm76, %v61, 0
    %80 = vmatpush.msra.mxu0 0.0
    %81 = vmatpush.msra.mxu0 0.0
    %82 = vmatpush.msra.mxu0 0.0
    %83 = vmatpush.msra.mxu0 0.0
    %84 = vmatpush.msra.mxu0 0.0
    %85 = vmatpush.msra.mxu0 0.0
    %86 = vmatpush.msra.mxu0 0.0
    %87 = vmatpush.msra.mxu0 0.0
    %88 = vmatpush.msra.mxu0 0.0
    %89 = vmatpush.msra.mxu0 0.0
    %90 = vmatpush.msra.mxu0 0.0
    %91 = vmatpush.msra.mxu0 0.0
    %92 = vmatpush.msra.mxu0 %v68
    %93 = vmatpush.msra.mxu0 %v66
    %94 = vmatpush.msra.mxu0 %v64
    %95 = vmatpush.msra.mxu0 %v62
    %96 = vmatmul.f32.gmra.mxu0 %v78
    %v97 = vpop.f32.mrf.mxu0
    %v98 = vadd.f32 %v72, %v97
    %99 = vdwg.mxu0
    %100 = vmatpush.msra.mxu0 0.0
    %101 = vmatpush.msra.mxu0 0.0
    %102 = vmatpush.msra.mxu0 0.0
    %103 = vmatpush.msra.mxu0 0.0
    %104 = vmatpush.msra.mxu0 0.0
    %105 = vmatpush.msra.mxu0 0.0
    %106 = vmatpush.msra.mxu0 0.0
    %107 = vmatpush.msra.mxu0 0.0
    %108 = vmatpush.msra.mxu0 0.0
    %109 = vmatpush.msra.mxu0 0.0
    %110 = vmatpush.msra.mxu0 0.0
    %111 = vmatpush.msra.mxu0 0.0
    %112 = vmatpush.msra.mxu0 %v69
    %113 = vmatpush.msra.mxu0 %v67
    %114 = vmatpush.msra.mxu0 %v65
    %115 = vmatpush.msra.mxu0 %v63
    %116 = vmatmul.f32.gmra.mxu0 %v78
    %v117 = vpop.f32.mrf.mxu0
    %v118 = vadd.f32 %v73, %v117
    %119 = vdwg.mxu0
    %v120 = vmax.f32 %v98, 0.0
    %v121 = vmax.f32 %v118, 0.0
    %v122 = vld [vmem:[%s3] sm:$0xff]
    %v123 = vld [vmem:[%s3 + $0x8] sm:$0xff]
    %v124 = vld [vmem:[%s3 + $0x10] sm:$0xff]
    %v125 = vld [vmem:[%s3 + $0x18] sm:$0xff]
    %v126 = vld [vmem:[%s3 + $0x20] sm:$0xff]
    %v127 = vld [vmem:[%s3 + $0x28] sm:$0xff]
    %v128 = vld [vmem:[%s3 + $0x30] sm:$0xff]
    %v129 = vld [vmem:[%s3 + $0x38] sm:$0xff]
    %v130 = vld [vmem:[%s3 + $0x40] sm:$0xff]
    %v131 = vld [vmem:[%s3 + $0x48] sm:$0xff]
    %v132 = vld [vmem:[%s3 + $0x50] sm:$0xff]
    %v133 = vld [vmem:[%s3 + $0x58] sm:$0xff]
    %v134 = vld [vmem:[%s3 + $0x60] sm:$0xff]
    %v135 = vld [vmem:[%s3 + $0x68] sm:$0xff]
    %v136 = vld [vmem:[%s3 + $0x70] sm:$0xff]
    %v137 = vld [vmem:[%s3 + $0x78] sm:$0xff]
    %v138 = vld [vmem:[%s3 + $0x80] sm:$0xff]
    %v139 = vld [vmem:[%s3 + $0x88] sm:$0xff]
    %v140 = vld [vmem:[%s3 + $0x90] sm:$0xff]
    %v141 = vld [vmem:[%s3 + $0x98] sm:$0xff]
    %v142 = vld [vmem:[%s3 + $0xa0] sm:$0xff]
    %v143 = vld [vmem:[%s3 + $0xa8] sm:$0xff]
    %v144 = vld [vmem:[%s3 + $0xb0] sm:$0xff]
    %v145 = vld [vmem:[%s3 + $0xb8] sm:$0xff]
    %v146 = vld [vmem:[%s3 + $0xc0] sm:$0xff]
    %v147 = vld [vmem:[%s3 + $0xc8] sm:$0xff]
    %v148 = vld [vmem:[%s3 + $0xd0] sm:$0xff]
    %v149 = vld [vmem:[%s3 + $0xd8] sm:$0xff]
    %v150 = vld [vmem:[%s3 + $0xe0] sm:$0xff]
    %v151 = vld [vmem:[%s3 + $0xe8] sm:$0xff]
    %v152 = vld [vmem:[%s3 + $0xf0] sm:$0xff]
    %v153 = vld [vmem:[%s3 + $0xf8] sm:$0xff]
    %v154 = vld [vmem:[%s4] sm:$0x1]
    %v156 = vperm.slane %v154, 0
    %158 = vmatpush.msra.mxu0 %v137
    %159 = vmatpush.msra.mxu0 %v136
    %160 = vmatpush.msra.mxu0 %v135
    %161 = vmatpush.msra.mxu0 %v134
    %162 = vmatpush.msra.mxu0 %v133
    %163 = vmatpush.msra.mxu0 %v132
    %164 = vmatpush.msra.mxu0 %v131
    %165 = vmatpush.msra.mxu0 %v130
    %166 = vmatpush.msra.mxu0 %v129
    %167 = vmatpush.msra.mxu0 %v128
    %168 = vmatpush.msra.mxu0 %v127
    %169 = vmatpush.msra.mxu0 %v126
    %170 = vmatpush.msra.mxu0 %v125
    %171 = vmatpush.msra.mxu0 %v124
    %172 = vmatpush.msra.mxu0 %v123
    %173 = vmatpush.msra.mxu0 %v122
    %174 = vmatmul.f32.gmra.mxu0 %v120
    %v175 = vpop.f32.mrf.mxu0
    %v176 = vadd.f32 %v156, %v175
    %177 = vdwg.mxu0
    %178 = vmatpush.msra.mxu0 %v153
    %179 = vmatpush.msra.mxu0 %v152
    %180 = vmatpush.msra.mxu0 %v151
    %181 = vmatpush.msra.mxu0 %v150
    %182 = vmatpush.msra.mxu0 %v149
    %183 = vmatpush.msra.mxu0 %v148
    %184 = vmatpush.msra.mxu0 %v147
    %185 = vmatpush.msra.mxu0 %v146
    %186 = vmatpush.msra.mxu0 %v145
    %187 = vmatpush.msra.mxu0 %v144
    %188 = vmatpush.msra.mxu0 %v143
    %189 = vmatpush.msra.mxu0 %v142
    %190 = vmatpush.msra.mxu0 %v141
    %191 = vmatpush.msra.mxu0 %v140
    %192 = vmatpush.msra.mxu0 %v139
    %193 = vmatpush.msra.mxu0 %v138
    %194 = vmatmul.f32.gmra.mxu0 %v121
    %v195 = vpop.f32.mrf.mxu0
    %v196 = vadd.f32 %v176, %v195
    %197 = vdwg.mxu0
    %v198 = vmax.f32 %v196, 0.0
    %v199 = vld [vmem:[%s5] sm:$0xff]
    %v200 = vld [vmem:[%s5 + $0x8] sm:$0xff]
    %v201 = vld [vmem:[%s5 + $0x10] sm:$0xff]
    %v202 = vld [vmem:[%s5 + $0x18] sm:$0xff]
    %v203 = vld [vmem:[%s5 + $0x20] sm:$0xff]
    %v204 = vld [vmem:[%s5 + $0x28] sm:$0xff]
    %v205 = vld [vmem:[%s5 + $0x30] sm:$0xff]
    %v206 = vld [vmem:[%s5 + $0x38] sm:$0xff]
    %v207 = vld [vmem:[%s5 + $0x40] sm:$0xff]
    %v208 = vld [vmem:[%s5 + $0x48] sm:$0xff]
    %v209 = vld [vmem:[%s5 + $0x50] sm:$0xff]
    %v210 = vld [vmem:[%s5 + $0x58] sm:$0xff]
    %v211 = vld [vmem:[%s5 + $0x60] sm:$0xff]
    %v212 = vld [vmem:[%s5 + $0x68] sm:$0xff]
    %v213 = vld [vmem:[%s5 + $0x70] sm:$0xff]
    %v214 = vld [vmem:[%s5 + $0x78] sm:$0xff]
    %v215 = vld [vmem:[%s6] sm:$0x1]
    %v217 = vperm.slane %v215, 0
    %219 = vmatpush.msra.mxu0 %v214
    %220 = vmatpush.msra.mxu0 %v213
    %221 = vmatpush.msra.mxu0 %v212
    %222 = vmatpush.msra.mxu0 %v211
    %223 = vmatpush.msra.mxu0 %v210
    %224 = vmatpush.msra.mxu0 %v209
    %225 = vmatpush.msra.mxu0 %v208
    %226 = vmatpush.msra.mxu0 %v207
    %227 = vmatpush.msra.mxu0 %v206
    %228 = vmatpush.msra.mxu0 %v205
    %229 = vmatpush.msra.mxu0 %v204
    %230 = vmatpush.msra.mxu0 %v203
    %231 = vmatpush.msra.mxu0 %v202
    %232 = vmatpush.msra.mxu0 %v201
    %233 = vmatpush.msra.mxu0 %v200
    %234 = vmatpush.msra.mxu0 %v199
    %235 = vmatmul.f32.gmra.mxu0 %v198
    %v236 = vpop.f32.mrf.mxu0
    %v237 = vadd.f32 %v217, %v236
    %238 = vdwg.mxu0
    %v239 = vmax.f32 %v237, 0.0
    %v240 = vld [vmem:[%s7] sm:$0xff]
    %v241 = vld [vmem:[%s7 + $0x8] sm:$0xff]
    %v242 = vld [vmem:[%s7 + $0x10] sm:$0xff]
    %v243 = vld [vmem:[%s7 + $0x18] sm:$0xff]
    %v244 = vld [vmem:[%s7 + $0x20] sm:$0xff]
    %v245 = vld [vmem:[%s7 + $0x28] sm:$0xff]
    %v246 = vld [vmem:[%s7 + $0x30] sm:$0xff]
    %v247 = vld [vmem:[%s7 + $0x38] sm:$0xff]
    %v248 = vld [vmem:[%s8] sm:$0x1]
    %v250 = vperm.slane %v248, 0
    %vm252 = vcmask 523264
    %v254 = vsel %vm252, %v239, 0
    %256 = vmatpush.msra.mxu0 0.0
    %257 = vmatpush.msra.mxu0 0.0
    %258 = vmatpush.msra.mxu0 0.0
    %259 = vmatpush.msra.mxu0 0.0
    %260 = vmatpush.msra.mxu0 0.0
    %261 = vmatpush.msra.mxu0 0.0
    %262 = vmatpush.msra.mxu0 0.0
    %263 = vmatpush.msra.mxu0 0.0
    %264 = vmatpush.msra.mxu0 %v247
    %265 = vmatpush.msra.mxu0 %v246
    %266 = vmatpush.msra.mxu0 %v245
    %267 = vmatpush.msra.mxu0 %v244
    %268 = vmatpush.msra.mxu0 %v243
    %269 = vmatpush.msra.mxu0 %v242
    %270 = vmatpush.msra.mxu0 %v241
    %271 = vmatpush.msra.mxu0 %v240
    %272 = vmatmul.f32.gmra.mxu0 %v254
    %v273 = vpop.f32.mrf.mxu0
    %v274 = vadd.f32 %v250, %v273
    %275 = vdwg.mxu0
    %v276 = vmax.f32 %v274, 0.0
    %v277 = vld [vmem:[#allocation2] sm:$0xff]
    %v278 = vld [vmem:[#allocation2 + $0x8] sm:$0xff]
    %v279 = vld [vmem:[#allocation2 + $0x10] sm:$0xff]
    %v280 = vld [vmem:[#allocation2 + $0x18] sm:$0xff]
    %v281 = vld [vmem:[#allocation2 + $0x20] sm:$0xff]
    %v282 = vld [vmem:[#allocation2 + $0x28] sm:$0xff]
    %v283 = vld [vmem:[#allocation2 + $0x30] sm:$0xff]
    %v284 = vld [vmem:[#allocation2 + $0x38] sm:$0xff]
    %v285 = vld [vmem:[#allocation2 + $0x40] sm:$0xff]
    %v286 = vld [vmem:[#allocation2 + $0x48] sm:$0xff]
    %v287 = vld [vmem:[#allocation2 + $0x50] sm:$0xff]
    %v288 = vld [vmem:[#allocation2 + $0x58] sm:$0xff]
    %v289 = vld [vmem:[#allocation2 + $0x60] sm:$0xff]
    %v290 = vld [vmem:[#allocation2 + $0x68] sm:$0xff]
    %v291 = vld [vmem:[#allocation2 + $0x70] sm:$0xff]
    %v292 = vld [vmem:[#allocation2 + $0x78] sm:$0xff]
    %v293 = vld [vmem:[#allocation2 + $0x80] sm:$0xff]
    %v294 = vld [vmem:[#allocation2 + $0x88] sm:$0xff]
    %v295 = vld [vmem:[#allocation2 + $0x90] sm:$0xff]
    %v296 = vld [vmem:[#allocation2 + $0x98] sm:$0xff]
    %v297 = vld [vmem:[#allocation2 + $0xa0] sm:$0xff]
    %v298 = vld [vmem:[#allocation2 + $0xa8] sm:$0xff]
    %v299 = vld [vmem:[#allocation2 + $0xb0] sm:$0xff]
    %v300 = vld [vmem:[#allocation2 + $0xb8] sm:$0xff]
    %v301 = vld [vmem:[#allocation2 + $0xc0] sm:$0xff]
    %v302 = vld [vmem:[#allocation2 + $0xc8] sm:$0xff]
    %v303 = vld [vmem:[#allocation2 + $0xd0] sm:$0xff]
    %v304 = vld [vmem:[#allocation2 + $0xd8] sm:$0xff]
    %v305 = vld [vmem:[#allocation2 + $0xe0] sm:$0xff]
    %v306 = vld [vmem:[#allocation2 + $0xe8] sm:$0xff]
    %v307 = vld [vmem:[#allocation2 + $0xf0] sm:$0xff]
    %v308 = vld [vmem:[#allocation2 + $0xf8] sm:$0xff]
    %v309 = vld [vmem:[%s10] sm:$0x3]
    %v311 = vperm.slane %v309, 0
    %v312 = vperm.slane %v309, 1
    %315 = vmatpush.msra.mxu0 %v307
    %316 = vmatpush.msra.mxu0 %v305
    %317 = vmatpush.msra.mxu0 %v303
    %318 = vmatpush.msra.mxu0 %v301
    %319 = vmatpush.msra.mxu0 %v299
    %320 = vmatpush.msra.mxu0 %v297
    %321 = vmatpush.msra.mxu0 %v295
    %322 = vmatpush.msra.mxu0 %v293
    %323 = vmatpush.msra.mxu0 %v291
    %324 = vmatpush.msra.mxu0 %v289
    %325 = vmatpush.msra.mxu0 %v287
    %326 = vmatpush.msra.mxu0 %v285
    %327 = vmatpush.msra.mxu0 %v283
    %328 = vmatpush.msra.mxu0 %v281
    %329 = vmatpush.msra.mxu0 %v279
    %330 = vmatpush.msra.mxu0 %v277
    %331 = vmatmul.f32.gmra.mxu0 %v276
    %v332 = vpop.f32.mrf.mxu0
    %v333 = vadd.f32 %v311, %v332
    %334 = vdwg.mxu0
    %335 = vmatpush.msra.mxu0 %v308
    %336 = vmatpush.msra.mxu0 %v306
    %337 = vmatpush.msra.mxu0 %v304
    %338 = vmatpush.msra.mxu0 %v302
    %339 = vmatpush.msra.mxu0 %v300
    %340 = vmatpush.msra.mxu0 %v298
    %341 = vmatpush.msra.mxu0 %v296
    %342 = vmatpush.msra.mxu0 %v294
    %343 = vmatpush.msra.mxu0 %v292
    %344 = vmatpush.msra.mxu0 %v290
    %345 = vmatpush.msra.mxu0 %v288
    %346 = vmatpush.msra.mxu0 %v286
    %347 = vmatpush.msra.mxu0 %v284
    %348 = vmatpush.msra.mxu0 %v282
    %349 = vmatpush.msra.mxu0 %v280
    %350 = vmatpush.msra.mxu0 %v278
    %351 = vmatmul.f32.gmra.mxu0 %v276
    %v352 = vpop.f32.mrf.mxu0
    %v353 = vadd.f32 %v312, %v352
    %354 = vdwg.mxu0
    %v355 = vmax.f32 %v333, 0.0
    %v356 = vmax.f32 %v353, 0.0
    %v357 = vld [vmem:[%s11] sm:$0xff]
    %v358 = vld [vmem:[%s11 + $0x8] sm:$0xff]
    %v359 = vld [vmem:[%s11 + $0x10] sm:$0xff]
    %v360 = vld [vmem:[%s11 + $0x18] sm:$0xff]
    %v361 = vld [vmem:[%s11 + $0x20] sm:$0xff]
    %v362 = vld [vmem:[%s11 + $0x28] sm:$0xff]
    %v363 = vld [vmem:[%s11 + $0x30] sm:$0xff]
    %v364 = vld [vmem:[%s11 + $0x38] sm:$0xff]
    %v365 = vld [vmem:[%s11 + $0x40] sm:$0xff]
    %v366 = vld [vmem:[%s11 + $0x48] sm:$0xff]
    %v367 = vld [vmem:[%s11 + $0x50] sm:$0xff]
    %v368 = vld [vmem:[%s11 + $0x58] sm:$0xff]
    %v369 = vld [vmem:[%s11 + $0x60] sm:$0xff]
    %v370 = vld [vmem:[%s11 + $0x68] sm:$0xff]
    %v371 = vld [vmem:[%s11 + $0x70] sm:$0xff]
    %v372 = vld [vmem:[%s11 + $0x78] sm:$0xff]
    %v373 = vld [vmem:[%s11 + $0x80] sm:$0xff]
    %v374 = vld [vmem:[%s11 + $0x88] sm:$0xff]
    %v375 = vld [vmem:[%s11 + $0x90] sm:$0xff]
    %v376 = vld [vmem:[%s11 + $0x98] sm:$0xff]
    %v377 = vld [vmem:[%s11 + $0xa0] sm:$0xff]
    %v378 = vld [vmem:[%s11 + $0xa8] sm:$0xff]
    %v379 = vld [vmem:[%s11 + $0xb0] sm:$0xff]
    %v380 = vld [vmem:[%s11 + $0xb8] sm:$0xff]
    %v381 = vld [vmem:[%s11 + $0xc0] sm:$0xff]
    %v382 = vld [vmem:[%s11 + $0xc8] sm:$0xff]
    %v383 = vld [vmem:[%s11 + $0xd0] sm:$0xff]
    %v384 = vld [vmem:[%s11 + $0xd8] sm:$0xff]
    %v385 = vld [vmem:[%s11 + $0xe0] sm:$0xff]
    %v386 = vld [vmem:[%s11 + $0xe8] sm:$0xff]
    %v387 = vld [vmem:[%s11 + $0xf0] sm:$0xff]
    %v388 = vld [vmem:[%s11 + $0xf8] sm:$0xff]
    %v389 = vld [vmem:[%s12] sm:$0x1]
    %v391 = vperm.slane %v389, 0
    %393 = vmatpush.msra.mxu0 %v372
    %394 = vmatpush.msra.mxu0 %v371
    %395 = vmatpush.msra.mxu0 %v370
    %396 = vmatpush.msra.mxu0 %v369
    %397 = vmatpush.msra.mxu0 %v368
    %398 = vmatpush.msra.mxu0 %v367
    %399 = vmatpush.msra.mxu0 %v366
    %400 = vmatpush.msra.mxu0 %v365
    %401 = vmatpush.msra.mxu0 %v364
    %402 = vmatpush.msra.mxu0 %v363
    %403 = vmatpush.msra.mxu0 %v362
    %404 = vmatpush.msra.mxu0 %v361
    %405 = vmatpush.msra.mxu0 %v360
    %406 = vmatpush.msra.mxu0 %v359
    %407 = vmatpush.msra.mxu0 %v358
    %408 = vmatpush.msra.mxu0 %v357
    %409 = vmatmul.f32.gmra.mxu0 %v355
    %v410 = vpop.f32.mrf.mxu0
    %v411 = vadd.f32 %v391, %v410
    %412 = vdwg.mxu0
    %413 = vmatpush.msra.mxu0 %v388
    %414 = vmatpush.msra.mxu0 %v387
    %415 = vmatpush.msra.mxu0 %v386
    %416 = vmatpush.msra.mxu0 %v385
    %417 = vmatpush.msra.mxu0 %v384
    %418 = vmatpush.msra.mxu0 %v383
    %419 = vmatpush.msra.mxu0 %v382
    %420 = vmatpush.msra.mxu0 %v381
    %421 = vmatpush.msra.mxu0 %v380
    %422 = vmatpush.msra.mxu0 %v379
    %423 = vmatpush.msra.mxu0 %v378
    %424 = vmatpush.msra.mxu0 %v377
    %425 = vmatpush.msra.mxu0 %v376
    %426 = vmatpush.msra.mxu0 %v375
    %427 = vmatpush.msra.mxu0 %v374
    %428 = vmatpush.msra.mxu0 %v373
    %429 = vmatmul.f32.gmra.mxu0 %v356
    %v430 = vpop.f32.mrf.mxu0
    %v431 = vadd.f32 %v411, %v430
    %432 = vdwg.mxu0
    %v433 = vxor.u32 %v431, 2147483648
    %v434 = vmul.f32 %v433, 1.442695
    %v435 = vpow.pop %v434
    %v436 = vadd.f32 %v435, 1.0
    %v437 = vrcp.pop %v436
    %v438 = vmul.f32 %v436, %v437
    %v439 = vsub.f32 1.0, %v438
    %v440 = vmul.f32 %v437, %v439
    %v441 = vadd.f32 %v437, %v440
    %vm442 = vweird.f32 %v436
    %vm443 = vweird.f32 %v437
    %vm444 = vmor %vm442, %vm443
    %v445 = vsel %vm444, %v437, %v441
    %v446 = vand.u32 2147483647, %v436
    %vm447 = vcmp.eq.f32.partialorder %v446, 8.507059e+37
    %v448 = vand.u32 %v436, 2147483648
    %v449 = vor.u32 1.1754944e-38, %v448
    %v450 = vsel %vm447, %v449, %v445
    %v451 = vmul.f32 1.0, %v450
    %452 = vst.msk [vmem:[#allocation5] sm:$0xff] %vm76, %v451
    // Predicated region
    $region58: #{autoencoder_forward.1} parent=1 // pred_check
      _
    $region59: #{autoencoder_forward.1} parent=1 // pred_check_branch
      %454 = sbr.rel (0) target = $region61
    $region60: #{autoencoder_forward.1} parent=1 // pred_region
      %456 = vsyncadd [#allocation4], 0
      %s458 = sshll.u32 [#allocation5], 4
      %s459 = int_to_ptr.vmem [resolvable:$true] %s458
      %s460 = sshll.u32 %s13, 4
      %s461 = int_to_ptr.hbm [resolvable:$true] %s460
      %463 = dma.vmem_to_hbm [thread:$0]  %s459, 128, %s461, [#allocation4]
    $region61: #{autoencoder_forward.1} parent=1 // pred_fallthru
      _
    // Predicated region
    $region62: #{autoencoder_forward.1} parent=1 // pred_check
      _
    $region63: #{autoencoder_forward.1} parent=1 // pred_check_branch
      %465 = sbr.rel (0) target = $region65
    $region64: #{autoencoder_forward.1} parent=1 // pred_region
      %467 = dma.done [#allocation4], 128
    $region65: #{autoencoder_forward.1} parent=1 // pred_fallthru
      _
    %468 = vsyncpa [#allocation3], 1
    %469 = vsyncpa [#allocation4], 1

</llo_original>
